<compile_context>
chip_gen: v7x
topology: tpu7x:2x2x1
jax: 0.10.0
libtpu: 0.0.40
codegen_flags: <defaults>
</compile_context>

<pallas_src>
import math
import jax
import jax.numpy as jnp
from jax.experimental import pallas as pl
from jax.experimental.pallas import tpu as pltpu


def _round_up(x, m):
    return ((x + m - 1) // m) * m


def _make_encoder_kernel(n_hidden, activation, compute_dtype):
    """Kernel args: (z, [Wh, bh]*n_hidden, W_head, b_head, out)."""

    def act(h):
        # PyTorch module maps anything other than 'tanh' / 'relu' to ReLU too.
        if activation == "tanh":
            return jnp.tanh(h)
        return jnp.maximum(h, 0.0)

    def kernel(*refs):
        z_ref = refs[0]
        h = z_ref[...]
        idx = 1
        for _ in range(n_hidden):
            w_ref, b_ref = refs[idx], refs[idx + 1]
            idx += 2
            pre = (
                jnp.dot(h, w_ref[...], preferred_element_type=jnp.float32)
                + b_ref[...]
            )
            # activation + bias epilogue in f32 (v5e has no bf16 VPU/EUP),
            # cast back to the MXU operand dtype for the next matmul.
            h = act(pre).astype(compute_dtype)
        w_ref, b_ref, out_ref = refs[idx], refs[idx + 1], refs[idx + 2]
        out_ref[...] = (
            jnp.dot(h, w_ref[...], preferred_element_type=jnp.float32)
            + b_ref[...]
        )

    return kernel


def init_encoder_params(key, n_inputs, lat_size, hidden=(10,)):
    """Deterministic PyTorch-style (uniform +/- 1/sqrt(fan_in)) init.

    Weights stored transposed as (in, out) so kernel computes y = x @ W + b.
    """
    params = {"hidden_w": [], "hidden_b": []}
    fan_in = n_inputs
    for h in hidden:
        key, kw, kb = jax.random.split(key, 3)
        bound = 1.0 / math.sqrt(fan_in)
        params["hidden_w"].append(
            jax.random.uniform(kw, (fan_in, h), jnp.float32, -bound, bound)
        )
        params["hidden_b"].append(
            jax.random.uniform(kb, (h,), jnp.float32, -bound, bound)
        )
        fan_in = h
    bound = 1.0 / math.sqrt(fan_in)
    key, k1, k2, k3, k4 = jax.random.split(key, 5)
    params["wmu"] = jax.random.uniform(k1, (fan_in, lat_size), jnp.float32, -bound, bound)
    params["bmu"] = jax.random.uniform(k2, (lat_size,), jnp.float32, -bound, bound)
    params["wls"] = jax.random.uniform(k3, (fan_in, lat_size), jnp.float32, -bound, bound)
    params["bls"] = jax.random.uniform(k4, (lat_size,), jnp.float32, -bound, bound)
    return params


def prepare_encoder_params(params, dtype=jnp.float32):
    """One-time padding / fusion / cast of the weights (cache the result).

    * output (lane) dims zero-padded to multiples of 128,
    * row dims of all but the FIRST matmul padded to 128 (zero rows),
      so the first matmul consumes the raw concat(X, C) width directly,
    * mu / log_sigma heads fused into one [Wmu | Wls] matmul,
    * weights cast to `dtype` (f32 or bf16); biases kept f32 for the epilogue.

    Zero padding is numerically exact: padded pre-activation columns are 0,
    act(0) = 0 for tanh/relu, and the next layer's padded rows are zero anyway,
    so even an activation with act(0) != 0 would not leak into real outputs.
    """
    prepared = {"dtype": dtype, "hidden": []}
    n_inputs = params["hidden_w"][0].shape[0] if params["hidden_w"] else params["wmu"].shape[0]
    prepared["n_inputs"] = n_inputs
    first = True
    for w, b in zip(params["hidden_w"], params["hidden_b"]):
        fin, fout = w.shape
        fout_p = _round_up(fout, 128)
        rows_p = fin if first else _round_up(fin, 128)
        first = False
        w_p = jnp.pad(
            w.astype(jnp.float32), ((0, rows_p - fin), (0, fout_p - fout))
        ).astype(dtype)
        b_p = jnp.pad(b.astype(jnp.float32), (0, fout_p - fout)).reshape(1, fout_p)
        prepared["hidden"].append((w_p, b_p))

    w_head = jnp.concatenate(
        [params["wmu"].astype(jnp.float32), params["wls"].astype(jnp.float32)], axis=1
    )
    b_head = jnp.concatenate(
        [params["bmu"].astype(jnp.float32), params["bls"].astype(jnp.float32)], axis=0
    )
    fin, two_lat = w_head.shape
    rows_p = fin if first else _round_up(fin, 128)
    Lp = _round_up(two_lat, 128)
    prepared["w_head"] = jnp.pad(
        w_head, ((0, rows_p - fin), (0, Lp - two_lat))
    ).astype(dtype)
    prepared["b_head"] = jnp.pad(b_head, (0, Lp - two_lat)).reshape(1, Lp)
    prepared["lat_size"] = params["wmu"].shape[1]
    return prepared


def encoder_forward(X, prep, C=None, activation="tanh", max_tb=512,
                    single_buffer_weights=False):
    """Forward pass using prepared (pre-padded / pre-fused) params."""
    # ---- glue: concat of input and condition (plain JAX, outside kernel) ----
    Z = X if C is None else jnp.concatenate([X, C], axis=1)
    dtype = prep["dtype"]
    Z = Z.astype(dtype)
    B, Din = Z.shape
    assert Din == prep["n_inputs"], "input width must match prepared params"

    n_hidden = len(prep["hidden"])
    lat_size = prep["lat_size"]
    Lp = prep["w_head"].shape[1]

    # ---- batch tiling ------------------------------------------------------
    sub = 16 if dtype == jnp.bfloat16 else 8      # sublane packing
    tb = min(max_tb, _round_up(B, sub))
    B_pad = _round_up(B, tb)
    # v7x has 2 TensorCores: make the "parallel" batch axis >= 2 steps when
    # the batch is big enough to be worth splitting (no effect on v5e/v6e
    # correctness; they just run the loop).
    if B_pad // tb == 1 and B > 2 * 128:
        tb = _round_up(pl.cdiv(B, 2), sub)
        B_pad = _round_up(B, tb)
    if B_pad != B:
        Z = jnp.pad(Z, ((0, B_pad - B), (0, 0)))   # batch rows only, no lane pad

    # ---- args / specs ------------------------------------------------------
    kernel = _make_encoder_kernel(n_hidden, activation, dtype)
    wt_kwargs = (
        dict(pipeline_mode=pl.Buffered(1)) if single_buffer_weights else {}
    )

    args = [Z]
    # last dim of Z block == full feature dim -> legal without 128-padding.
    in_specs = [pl.BlockSpec((tb, Din), lambda i: (i, 0))]
    for w_p, b_p in prep["hidden"]:
        args += [w_p, b_p]
        in_specs += [
            pl.BlockSpec(w_p.shape, lambda i: (0, 0), **wt_kwargs),
            pl.BlockSpec(b_p.shape, lambda i: (0, 0), **wt_kwargs),
        ]
    args += [prep["w_head"], prep["b_head"]]
    in_specs += [
        pl.BlockSpec(prep["w_head"].shape, lambda i: (0, 0), **wt_kwargs),
        pl.BlockSpec(prep["b_head"].shape, lambda i: (0, 0), **wt_kwargs),
    ]

    out_shape = jax.ShapeDtypeStruct((B_pad, Lp), jnp.float32)
    out_specs = pl.BlockSpec((tb, Lp), lambda i: (i, 0))

    # ---- advisory cost estimate (helps XLA overlap the glue ops) -----------
    flops = 0
    trans = 0
    weight_bytes = 0
    for w_p, b_p in prep["hidden"]:
        flops += 2 * B_pad * w_p.shape[0] * w_p.shape[1]
        if activation == "tanh":
            trans += B_pad * w_p.shape[1]
        weight_bytes += w_p.nbytes + b_p.nbytes
    flops += 2 * B_pad * prep["w_head"].shape[0] * Lp
    weight_bytes += prep["w_head"].nbytes + prep["b_head"].nbytes
    cost = pl.CostEstimate(
        flops=int(flops),
        transcendentals=int(trans),
        bytes_accessed=int(Z.nbytes + weight_bytes + B_pad * Lp * 4),
    )

    out = pl.pallas_call(
        kernel,
        out_shape=out_shape,
        grid_spec=pltpu.PrefetchScalarGridSpec(
            num_scalar_prefetch=0,
            grid=(B_pad // tb,),
            in_specs=in_specs,
            out_specs=out_specs,
        ),
        compiler_params=pltpu.CompilerParams(
            dimension_semantics=("parallel",),
        ),
        cost_estimate=cost,
    )(*args)

    # ---- slice real rows / columns straight out of the kernel output -------
    mu = out[:B, :lat_size]
    log_sigma = out[:B, lat_size: 2 * lat_size]
    return mu, log_sigma


def encoder_reference(X, params, C=None, activation="tanh"):
    """Pure-JAX reference mirroring the PyTorch forward."""
    Z = X if C is None else jnp.concatenate([X, C], axis=1)
    for w, b in zip(params["hidden_w"], params["hidden_b"]):
        Z = Z @ w + b
        Z = jnp.tanh(Z) if activation == "tanh" else jnp.maximum(Z, 0.0)
    mu = Z @ params["wmu"] + params["bmu"]
    log_sigma = Z @ params["wls"] + params["bls"]
    return mu, log_sigma


if __name__ == "__main__":
    # Small shapes implied by the module: X:[batch, var_size], C:[batch, cond_size]
    batch, var_size, cond_size = 8, 4, 4
    hidden = (32,)
    lat_size = 8
    n_inputs = var_size + cond_size  # Encoder operates on concat(X, C)

    key = jax.random.PRNGKey(0)
    key, kx, kc, kp = jax.random.split(key, 4)
    X = jax.random.normal(kx, (batch, var_size), jnp.float32)
    C = jax.random.normal(kc, (batch, cond_size), jnp.float32)
    params = init_encoder_params(kp, n_inputs, lat_size, hidden)

    mu_ref, ls_ref = encoder_reference(X, params, C=C, activation="tanh")

    # --- f32 operands: exact match with the PyTorch-style reference ---------
    prep_f32 = prepare_encoder_params(params, dtype=jnp.float32)   # one-time
    mu, log_sigma = encoder_forward(X, prep_f32, C=C, activation="tanh")
    jax.block_until_ready((mu, log_sigma))
    assert mu.shape == (batch, lat_size) and log_sigma.shape == (batch, lat_size)
    assert jnp.allclose(mu, mu_ref, atol=1e-5, rtol=1e-5)
    assert jnp.allclose(log_sigma, ls_ref, atol=1e-5, rtol=1e-5)

    # --- bf16 MXU operands (f32 accumulate/epilogue): looser tolerance ------
    prep_bf16 = prepare_encoder_params(params, dtype=jnp.bfloat16)  # one-time
    mu16, ls16 = encoder_forward(X, prep_bf16, C=C, activation="tanh")
    jax.block_until_ready((mu16, ls16))
    assert jnp.allclose(mu16, mu_ref, atol=5e-2, rtol=5e-2)
    assert jnp.allclose(ls16, ls_ref, atol=5e-2, rtol=5e-2)

    print("KERNEL_OK")
</pallas_src>

<mosaic_0001>
module attributes {stable_mosaic.version = 11 : i64} {
  func.func @kernel(%arg0: i32, %arg1: memref<8x8xf32, #tpu.memory_space<vmem>>, %arg2: memref<8x128xf32, #tpu.memory_space<vmem>>, %arg3: memref<1x128xf32, #tpu.memory_space<vmem>>, %arg4: memref<128x128xf32, #tpu.memory_space<vmem>>, %arg5: memref<1x128xf32, #tpu.memory_space<vmem>>, %arg6: memref<8x128xf32, #tpu.memory_space<vmem>>) attributes {dimension_semantics = [#tpu.dimension_semantics<parallel>], iteration_bounds = array<i64: 1>, scalar_prefetch = 0 : i64, scratch_operands = 0 : i64, tpu.core_type = #tpu.core_type<tc>, window_params = [{transform_indices = @transform_0, window_bounds = array<i64: 8, 8>}, {pipeline_mode = #tpu.pipeline_mode<synchronous>, transform_indices = @transform_1, window_bounds = array<i64: 8, 128>}, {pipeline_mode = #tpu.pipeline_mode<synchronous>, transform_indices = @transform_2, window_bounds = array<i64: 1, 128>}, {pipeline_mode = #tpu.pipeline_mode<synchronous>, transform_indices = @transform_3, window_bounds = array<i64: 128, 128>}, {pipeline_mode = #tpu.pipeline_mode<synchronous>, transform_indices = @transform_4, window_bounds = array<i64: 1, 128>}, {transform_indices = @transform_5, window_bounds = array<i64: 8, 128>}]} {
    %c0 = arith.constant 0 : index
    %c0_0 = arith.constant 0 : index
    %0 = vector.load %arg1[%c0, %c0_0] : memref<8x8xf32, #tpu.memory_space<vmem>>, vector<8x8xf32>
    %c0_1 = arith.constant 0 : index
    %c0_2 = arith.constant 0 : index
    %1 = vector.load %arg2[%c0_1, %c0_2] : memref<8x128xf32, #tpu.memory_space<vmem>>, vector<8x128xf32>
    %cst = arith.constant dense<0.000000e+00> : vector<8x128xf32>
    %2 = tpu.matmul %0, %1, %cst {dimension_numbers = #tpu.dot_dimension_numbers<[1], [0], [0], [1], [0, 0, 1, 1], [], []>} : vector<8x8xf32>, vector<8x128xf32>, vector<8x128xf32> -> vector<8x128xf32>
    %c0_3 = arith.constant 0 : index
    %c0_4 = arith.constant 0 : index
    %3 = vector.load %arg3[%c0_3, %c0_4] : memref<1x128xf32, #tpu.memory_space<vmem>>, vector<1x128xf32>
    %4 = vector.broadcast %3 : vector<1x128xf32> to vector<8x128xf32>
    %5 = arith.addf %2, %4 : vector<8x128xf32>
    %6 = math.tanh %5 : vector<8x128xf32>
    %c0_5 = arith.constant 0 : index
    %c0_6 = arith.constant 0 : index
    %7 = vector.load %arg4[%c0_5, %c0_6] : memref<128x128xf32, #tpu.memory_space<vmem>>, vector<128x128xf32>
    %cst_7 = arith.constant dense<0.000000e+00> : vector<8x128xf32>
    %8 = tpu.matmul %6, %7, %cst_7 {dimension_numbers = #tpu.dot_dimension_numbers<[1], [0], [0], [1], [0, 0, 1, 1], [], []>} : vector<8x128xf32>, vector<128x128xf32>, vector<8x128xf32> -> vector<8x128xf32>
    %c0_8 = arith.constant 0 : index
    %c0_9 = arith.constant 0 : index
    %9 = vector.load %arg5[%c0_8, %c0_9] : memref<1x128xf32, #tpu.memory_space<vmem>>, vector<1x128xf32>
    %10 = vector.broadcast %9 : vector<1x128xf32> to vector<8x128xf32>
    %11 = arith.addf %8, %10 : vector<8x128xf32>
    %c0_10 = arith.constant 0 : index
    %c0_11 = arith.constant 0 : index
    %12 = vector.load %arg6[%c0_10, %c0_11] : memref<8x128xf32, #tpu.memory_space<vmem>>, vector<8x128xf32>
    tpu.vector_store %arg6[%c0_10, %c0_11], %11 {strides = array<i32>} : memref<8x128xf32, #tpu.memory_space<vmem>>, vector<8x128xf32>,
    return
  }
  func.func @transform_0(%arg0: i32) -> (i32, i32) {
    %c0_i32 = arith.constant 0 : i32
    %c0_i32_0 = arith.constant 0 : i32
    return %arg0, %c0_i32 : i32, i32
  }
  func.func @transform_1(%arg0: i32) -> (i32, i32) {
    %c0_i32 = arith.constant 0 : i32
    %c0_i32_0 = arith.constant 0 : i32
    %c0_i32_1 = arith.constant 0 : i32
    return %c0_i32, %c0_i32_0 : i32, i32
  }
  func.func @transform_2(%arg0: i32) -> (i32, i32) {
    %c0_i32 = arith.constant 0 : i32
    %c0_i32_0 = arith.constant 0 : i32
    %c0_i32_1 = arith.constant 0 : i32
    return %c0_i32, %c0_i32_0 : i32, i32
  }
  func.func @transform_3(%arg0: i32) -> (i32, i32) {
    %c0_i32 = arith.constant 0 : i32
    %c0_i32_0 = arith.constant 0 : i32
    %c0_i32_1 = arith.constant 0 : i32
    return %c0_i32, %c0_i32_0 : i32, i32
  }
  func.func @transform_4(%arg0: i32) -> (i32, i32) {
    %c0_i32 = arith.constant 0 : i32
    %c0_i32_0 = arith.constant 0 : i32
    %c0_i32_1 = arith.constant 0 : i32
    return %c0_i32, %c0_i32_0 : i32, i32
  }
  func.func @transform_5(%arg0: i32) -> (i32, i32) {
    %c0_i32 = arith.constant 0 : i32
    %c0_i32_0 = arith.constant 0 : i32
    return %arg0, %c0_i32 : i32, i32
  }
}

</mosaic_0001>

<llo_original>
// kernel: tpu_custom_call.1
$region0: #{tpu_custom_call.1}
  #allocation0 [shape = 'u32[]', space=smem, size = 0x4, offset = 0x4, fixed_abs, tag = 'smem constant byte address 0x4 - core index']
  #allocation1 [shape = 'u32[144,128]{1,0:T(1,128)}', space=vmem, size = 0x12000, scoped, tag = 'internal scratch']
  %s0 = inlined_call_operand.hbm [shape: f32[8,8], index: 0, kind: input, shape index: {}]
  %s1 = inlined_call_operand.hbm [shape: f32[8,128], index: 1, kind: input, shape index: {}]
  %s2 = inlined_call_operand.vmem [shape: f32[1,128], index: 2, kind: input, shape index: {}]
  %s3 = inlined_call_operand.hbm [shape: f32[128,128], index: 3, kind: input, shape index: {}]
  %s4 = inlined_call_operand.vmem [shape: f32[1,128], index: 4, kind: input, shape index: {}]
  %s5 = inlined_call_operand.hbm [shape: f32[8,128], index: 5, kind: output, shape index: {}]
  %s6 = sld [smem:[#allocation0]]
  $region42: #{tpu_custom_call.1} parent=0
    _
  %s8 = ssub.s32 1, %s6
  %s9 = scalar_select 0, %s8, %s6
  $region1: #{tpu_custom_call.1} parent=0
    #allocation2 [shape = 'u8[4096]{0}', space=vmem, size = 0x1000, scoped, tag = 'input window, operand 0, single buffered']
    #allocation3 [shape = 's32[1]{0}', space=sflag, size = 0x4, scoped, tag = 'scoped memory for tpu_custom_call.1']
    #allocation4 [shape = 's32[1]{0}', space=sflag, size = 0x4, scoped, tag = 'scoped memory for tpu_custom_call.1']
    #allocation5 [shape = 'u8[4096]{0}', space=vmem, size = 0x1000, scoped, tag = 'input window, operand 1, single buffered']
    #allocation6 [shape = 's32[1]{0}', space=sflag, size = 0x4, scoped, tag = 'scoped memory for tpu_custom_call.1']
    #allocation7 [shape = 'u8[65536]{0}', space=vmem, size = 0x10000, scoped, tag = 'input window, operand 3, single buffered']
    #allocation8 [shape = 'u8[4096]{0}', space=vmem, size = 0x1000, scoped, tag = 'output window, operand 0, single buffered']
    %10 = vsyncpa [#allocation3], 0
    %11 = vsyncpa [#allocation6], 0
    %12 = vsyncpa [#allocation4], 0
    // Predicated region
    $region2: #{tpu_custom_call.1} parent=1 // pred_check
      _
    $region3: #{tpu_custom_call.1} parent=1 // pred_check_branch
      %14 = sbr.rel (0) target = $region5
    $region4: #{tpu_custom_call.1} parent=1 // pred_region
      %s16 = ssub.s32 128, 128
      %17 = vsyncadd [#allocation3], %s16
      %s19 = sshll.u32 [#allocation2], 4
      %s20 = int_to_ptr.vmem [resolvable:$true] %s19
      %22 = dma.hbm_to_vmem [thread:$0]  %s0, 128, %s20, [#allocation3]
    $region5: #{tpu_custom_call.1} parent=1 // pred_fallthru
      _
    // Predicated region
    $region6: #{tpu_custom_call.1} parent=1 // pred_check
      _
    $region7: #{tpu_custom_call.1} parent=1 // pred_check_branch
      %24 = sbr.rel (0) target = $region9
    $region8: #{tpu_custom_call.1} parent=1 // pred_region
      %s26 = ssub.s32 128, 128
      %27 = vsyncadd [#allocation6], %s26
      %s29 = sshll.u32 [#allocation5], 4
      %s30 = int_to_ptr.vmem [resolvable:$true] %s29
      %32 = dma.hbm_to_vmem [thread:$0]  %s1, 128, %s30, [#allocation6]
    $region9: #{tpu_custom_call.1} parent=1 // pred_fallthru
      _
    // Predicated region
    $region10: #{tpu_custom_call.1} parent=1 // pred_check
      _
    $region11: #{tpu_custom_call.1} parent=1 // pred_check_branch
      %34 = sbr.rel (0) target = $region13
    $region12: #{tpu_custom_call.1} parent=1 // pred_region
      _
    $region13: #{tpu_custom_call.1} parent=1 // pred_fallthru
      _
    // Predicated region
    $region14: #{tpu_custom_call.1} parent=1 // pred_check
      _
    $region15: #{tpu_custom_call.1} parent=1 // pred_check_branch
      %36 = sbr.rel (0) target = $region17
    $region16: #{tpu_custom_call.1} parent=1 // pred_region
      %s38 = ssub.s32 2048, 2048
      %39 = vsyncadd [#allocation6], %s38
      %s40 = sshll.u32 [#allocation7], 4
      %s41 = int_to_ptr.vmem [resolvable:$true] %s40
      %46 = dma.hbm_to_vmem [thread:$0]  %s3, 2048, %s41, [#allocation6], 128, 128, 8
    $region17: #{tpu_custom_call.1} parent=1 // pred_fallthru
      _
    // Predicated region
    $region18: #{tpu_custom_call.1} parent=1 // pred_check
      _
    $region19: #{tpu_custom_call.1} parent=1 // pred_check_branch
      %48 = sbr.rel (0) target = $region21
    $region20: #{tpu_custom_call.1} parent=1 // pred_region
      _
    $region21: #{tpu_custom_call.1} parent=1 // pred_fallthru
      _
    // Predicated region
    $region22: #{tpu_custom_call.1} parent=1 // pred_check
      _
    $region23: #{tpu_custom_call.1} parent=1 // pred_check_branch
      %50 = sbr.rel (0) target = $region25
    $region24: #{tpu_custom_call.1} parent=1 // pred_region
      %51 = dma.done [#allocation3], 128
    $region25: #{tpu_custom_call.1} parent=1 // pred_fallthru
      _
    // Predicated region
    $region26: #{tpu_custom_call.1} parent=1 // pred_check
      _
    $region27: #{tpu_custom_call.1} parent=1 // pred_check_branch
      %53 = sbr.rel (0) target = $region29
    $region28: #{tpu_custom_call.1} parent=1 // pred_region
      %54 = dma.done [#allocation6], 128
    $region29: #{tpu_custom_call.1} parent=1 // pred_fallthru
      _
    // Predicated region
    $region30: #{tpu_custom_call.1} parent=1 // pred_check
      _
    $region31: #{tpu_custom_call.1} parent=1 // pred_check_branch
      %56 = sbr.rel (0) target = $region33
    $region32: #{tpu_custom_call.1} parent=1 // pred_region
      %57 = dma.done [#allocation6], 2048
    $region33: #{tpu_custom_call.1} parent=1 // pred_fallthru
      _
    %v58 = vld [vmem:[#allocation2] sm:$0xff]
    %v59 = vld [vmem:[#allocation5] sm:$0xff]
    %v60 = vld [vmem:[%s2] sm:$0x1]
    %v62 = vlaneseq
    %v63 = vshrl.u32 %v62, 7
    %v64 = vsub.s32 0, %v63
    %v65 = vrot.slane %v60, %v64
    %vm67 = vcmask 64512
    %v69 = vsel %vm67, %v58, 0
    %71 = vmatprep.subr.mxu0 0.0
    %72 = vmatpush1.msra.mxu0 %v59
    %73 = vmatprep.subr.mxu0 0.0
    %74 = vmatpush1.msra.mxu0 0.0
    %75 = vmatprep.subr.mxu0 0.0
    %76 = vmatpush1.msra.mxu0 0.0
    %77 = vmatprep.subr.mxu0 0.0
    %78 = vmatpush1.msra.mxu0 0.0
    %79 = vmatprep.subr.mxu0 0.0
    %80 = vmatpush1.msra.mxu0 0.0
    %81 = vmatprep.subr.mxu0 0.0
    %82 = vmatpush1.msra.mxu0 0.0
    %83 = vmatprep.subr.mxu0 0.0
    %84 = vmatpush1.msra.mxu0 0.0
    %85 = vmatprep.subr.mxu0 0.0
    %86 = vmatpush1.msra.mxu0 0.0
    %87 = vmatprep.subr.mxu0 0.0
    %88 = vmatpush1.msra.mxu0 0.0
    %89 = vmatprep.subr.mxu0 0.0
    %90 = vmatpush1.msra.mxu0 0.0
    %91 = vmatprep.subr.mxu0 0.0
    %92 = vmatpush1.msra.mxu0 0.0
    %93 = vmatprep.subr.mxu0 0.0
    %94 = vmatpush1.msra.mxu0 0.0
    %95 = vmatprep.subr.mxu0 0.0
    %96 = vmatpush1.msra.mxu0 0.0
    %97 = vmatprep.subr.mxu0 0.0
    %98 = vmatpush1.msra.mxu0 0.0
    %99 = vmatprep.subr.mxu0 0.0
    %100 = vmatpush1.msra.mxu0 0.0
    %101 = vmatprep.subr.mxu0 0.0
    %102 = vmatpush1.msra.mxu0 0.0
    %103 = vmatprep.subr.mxu0 0.0
    %104 = vmatpush1.msra.mxu0 0.0
    %105 = vmatprep.subr.mxu0 0.0
    %106 = vmatpush1.msra.mxu0 0.0
    %107 = vmatprep.subr.mxu0 0.0
    %108 = vmatpush1.msra.mxu0 0.0
    %109 = vmatprep.subr.mxu0 0.0
    %110 = vmatpush1.msra.mxu0 0.0
    %111 = vmatprep.subr.mxu0 0.0
    %112 = vmatpush1.msra.mxu0 0.0
    %113 = vmatprep.subr.mxu0 0.0
    %114 = vmatpush1.msra.mxu0 0.0
    %115 = vmatprep.subr.mxu0 0.0
    %116 = vmatpush1.msra.mxu0 0.0
    %117 = vmatprep.subr.mxu0 0.0
    %118 = vmatpush1.msra.mxu0 0.0
    %119 = vmatprep.subr.mxu0 0.0
    %120 = vmatpush1.msra.mxu0 0.0
    %121 = vmatprep.subr.mxu0 0.0
    %122 = vmatpush1.msra.mxu0 0.0
    %123 = vmatprep.subr.mxu0 0.0
    %124 = vmatpush1.msra.mxu0 0.0
    %125 = vmatprep.subr.mxu0 0.0
    %126 = vmatpush1.msra.mxu0 0.0
    %127 = vmatprep.subr.mxu0 0.0
    %128 = vmatpush1.msra.mxu0 0.0
    %129 = vmatprep.subr.mxu0 0.0
    %130 = vmatpush1.msra.mxu0 0.0
    %131 = vmatprep.subr.mxu0 0.0
    %132 = vmatpush1.msra.mxu0 0.0
    %133 = vmatprep.subr.mxu0 0.0
    %134 = vmatpush1.msra.mxu0 0.0
    %135 = vmatprep.mubr.f32.mxu0 0.0
    %136 = vmatmul.mubr.f32.gmra.mrb[0].mxu0 %v69
    %v137 = vpop.f32.mrb[0].mxu0
    %v138 = vadd.f32 %v65, %v137
    %v139 = vpop.f32.mrb[0].mxu0
    %140 = vdwg.mxu0
    %v141 = vtanh.pop %v138
    %v142 = vld [vmem:[#allocation7] sm:$0xff]
    %v143 = vld [vmem:[#allocation7 + $0x8] sm:$0xff]
    %v144 = vld [vmem:[#allocation7 + $0x10] sm:$0xff]
    %v145 = vld [vmem:[#allocation7 + $0x18] sm:$0xff]
    %v146 = vld [vmem:[#allocation7 + $0x20] sm:$0xff]
    %v147 = vld [vmem:[#allocation7 + $0x28] sm:$0xff]
    %v148 = vld [vmem:[#allocation7 + $0x30] sm:$0xff]
    %v149 = vld [vmem:[#allocation7 + $0x38] sm:$0xff]
    %v150 = vld [vmem:[#allocation7 + $0x40] sm:$0xff]
    %v151 = vld [vmem:[#allocation7 + $0x48] sm:$0xff]
    %v152 = vld [vmem:[#allocation7 + $0x50] sm:$0xff]
    %v153 = vld [vmem:[#allocation7 + $0x58] sm:$0xff]
    %v154 = vld [vmem:[#allocation7 + $0x60] sm:$0xff]
    %v155 = vld [vmem:[#allocation7 + $0x68] sm:$0xff]
    %v156 = vld [vmem:[#allocation7 + $0x70] sm:$0xff]
    %v157 = vld [vmem:[#allocation7 + $0x78] sm:$0xff]
    %v158 = vld [vmem:[%s4] sm:$0x1]
    %v160 = vlaneseq
    %v161 = vshrl.u32 %v160, 7
    %v162 = vsub.s32 0, %v161
    %v163 = vrot.slane %v158, %v162
    %165 = vmatprep.subr.mxu0 0.0
    %166 = vmatpush1.msra.mxu0 %v142
    %167 = vmatprep.subr.mxu0 0.0
    %168 = vmatpush1.msra.mxu0 %v143
    %169 = vmatprep.subr.mxu0 0.0
    %170 = vmatpush1.msra.mxu0 %v144
    %171 = vmatprep.subr.mxu0 0.0
    %172 = vmatpush1.msra.mxu0 %v145
    %173 = vmatprep.subr.mxu0 0.0
    %174 = vmatpush1.msra.mxu0 %v146
    %175 = vmatprep.subr.mxu0 0.0
    %176 = vmatpush1.msra.mxu0 %v147
    %177 = vmatprep.subr.mxu0 0.0
    %178 = vmatpush1.msra.mxu0 %v148
    %179 = vmatprep.subr.mxu0 0.0
    %180 = vmatpush1.msra.mxu0 %v149
    %181 = vmatprep.subr.mxu0 0.0
    %182 = vmatpush1.msra.mxu0 %v150
    %183 = vmatprep.subr.mxu0 0.0
    %184 = vmatpush1.msra.mxu0 %v151
    %185 = vmatprep.subr.mxu0 0.0
    %186 = vmatpush1.msra.mxu0 %v152
    %187 = vmatprep.subr.mxu0 0.0
    %188 = vmatpush1.msra.mxu0 %v153
    %189 = vmatprep.subr.mxu0 0.0
    %190 = vmatpush1.msra.mxu0 %v154
    %191 = vmatprep.subr.mxu0 0.0
    %192 = vmatpush1.msra.mxu0 %v155
    %193 = vmatprep.subr.mxu0 0.0
    %194 = vmatpush1.msra.mxu0 %v156
    %195 = vmatprep.subr.mxu0 0.0
    %196 = vmatpush1.msra.mxu0 %v157
    %197 = vmatprep.subr.mxu0 0.0
    %198 = vmatpush1.msra.mxu0 0.0
    %199 = vmatprep.subr.mxu0 0.0
    %200 = vmatpush1.msra.mxu0 0.0
    %201 = vmatprep.subr.mxu0 0.0
    %202 = vmatpush1.msra.mxu0 0.0
    %203 = vmatprep.subr.mxu0 0.0
    %204 = vmatpush1.msra.mxu0 0.0
    %205 = vmatprep.subr.mxu0 0.0
    %206 = vmatpush1.msra.mxu0 0.0
    %207 = vmatprep.subr.mxu0 0.0
    %208 = vmatpush1.msra.mxu0 0.0
    %209 = vmatprep.subr.mxu0 0.0
    %210 = vmatpush1.msra.mxu0 0.0
    %211 = vmatprep.subr.mxu0 0.0
    %212 = vmatpush1.msra.mxu0 0.0
    %213 = vmatprep.subr.mxu0 0.0
    %214 = vmatpush1.msra.mxu0 0.0
    %215 = vmatprep.subr.mxu0 0.0
    %216 = vmatpush1.msra.mxu0 0.0
    %217 = vmatprep.subr.mxu0 0.0
    %218 = vmatpush1.msra.mxu0 0.0
    %219 = vmatprep.subr.mxu0 0.0
    %220 = vmatpush1.msra.mxu0 0.0
    %221 = vmatprep.subr.mxu0 0.0
    %222 = vmatpush1.msra.mxu0 0.0
    %223 = vmatprep.subr.mxu0 0.0
    %224 = vmatpush1.msra.mxu0 0.0
    %225 = vmatprep.subr.mxu0 0.0
    %226 = vmatpush1.msra.mxu0 0.0
    %227 = vmatprep.subr.mxu0 0.0
    %228 = vmatpush1.msra.mxu0 0.0
    %229 = vmatprep.mubr.f32.mxu0 0.0
    %230 = vmatmul.mubr.f32.gmra.mrb[0].mxu0 %v141
    %v231 = vpop.f32.mrb[0].mxu0
    %v232 = vadd.f32 %v163, %v231
    %v233 = vpop.f32.mrb[0].mxu0
    %234 = vdwg.mxu0
    %235 = vst [vmem:[#allocation8] sm:$0xff] %v232
    // Predicated region
    $region34: #{tpu_custom_call.1} parent=1 // pred_check
      _
    $region35: #{tpu_custom_call.1} parent=1 // pred_check_branch
      %237 = sbr.rel (0) target = $region37
    $region36: #{tpu_custom_call.1} parent=1 // pred_region
      %s239 = ssub.s32 128, 128
      %240 = vsyncadd [#allocation4], %s239
      %s242 = sshll.u32 [#allocation8], 4
      %s243 = int_to_ptr.vmem [resolvable:$true] %s242
      %245 = dma.vmem_to_hbm [thread:$0]  %s243, 128, %s5, [#allocation4]
    $region37: #{tpu_custom_call.1} parent=1 // pred_fallthru
      _
    // Predicated region
    $region38: #{tpu_custom_call.1} parent=1 // pred_check
      _
    $region39: #{tpu_custom_call.1} parent=1 // pred_check_branch
      %247 = sbr.rel (0) target = $region41
    $region40: #{tpu_custom_call.1} parent=1 // pred_region
      %248 = dma.done [#allocation4], 128
    $region41: #{tpu_custom_call.1} parent=1 // pred_fallthru
      _
    %249 = vsyncpa [#allocation3], 1
    %250 = vsyncpa [#allocation6], 1
    %251 = vsyncpa [#allocation4], 1

</llo_original>
